<compile_context>
chip_gen: v6e
topology: v6e:2x2x1
jax: 0.10.0
libtpu: 0.0.40
codegen_flags: <defaults>
</compile_context>

<pallas_src>
import functools

import jax
import jax.numpy as jnp
from jax.experimental import pallas as pl
from jax.experimental.pallas import tpu as pltpu

K = 7      # conv kernel size
PAD = 3    # reflect padding amount


def _conv7x7_kernel(x_ref, w_ref, b_ref, o_ref, patches_ref, *, wp):
    # x_ref:       (1, Cin, L)      reflect-padded input, spatial flattened to
    #                               Hp*Wp and lane-padded to L, bf16
    # w_ref:       (Cout, CKK)      flattened filters, rows ordered (kh, kw, cin)
    #                               with each kh block padded to 16-sublane mult, bf16
    # b_ref:       (Cout, 1)        bias, f32
    # o_ref:       (1, Cout, H*Wp)  output, NCHW order over padded width, f32
    # patches_ref: (CKK, H*Wp)      im2col scratch, spatial on lanes, bf16
    _, cin, _ell = x_ref.shape
    ckk, hw_out = patches_ref.shape
    cout = o_ref.shape[1]
    per_kh = ckk // K                  # K*Cin rounded up to a 16-sublane multiple
    pad_rows = per_kh - K * cin

    x_flat = x_ref[0]                  # (Cin, L) bf16, register-resident

    # im2col: for each kh, assemble one lane-dense (per_kh, H*Wp) row block from
    # 7 lane-shifted copies of the flat input (plus the zero pad rows of the
    # contraction axis) and store it with a single tile-aligned sublane write.
    for kh in range(K):
        slabs = []
        for kw in range(K):
            s = kh * wp + kw                           # flat lane shift of this tap
            slabs.append(x_flat[:, s:s + hw_out])      # (Cin, H*Wp), pure lane shift
        if pad_rows:
            slabs.append(jnp.zeros((pad_rows, hw_out), x_flat.dtype))
        patches_ref[kh * per_kh:(kh + 1) * per_kh, :] = jnp.concatenate(slabs, axis=0)

    # Single MXU matmul: (Cout, CKK) @ (CKK, H*Wp), f32 accumulation.  The
    # flattened spatial axis stays on lanes all the way to the output store.
    acc = jax.lax.dot_general(
        w_ref[...], patches_ref[...],
        dimension_numbers=(((1,), (0,)), ((), ())),
        preferred_element_type=jnp.float32)            # (Cout, H*Wp) f32
    acc = acc + b_ref[...]                             # (Cout, 1) lane-broadcast
    o_ref[...] = acc.reshape(1, cout, hw_out).astype(o_ref.dtype)


def feature_map_block(x_nchw, weight_oihw, bias):
    """Equivalent of FeatureMapBlock.forward (Conv2d 7x7, reflect pad 3, bias).

    x_nchw:      (N, Cin, H, W)
    weight_oihw: (Cout, Cin, 7, 7)  -- PyTorch Conv2d weight layout
    bias:        (Cout,)
    returns:     (N, Cout, H, W)
    """
    N, Cin, H, W = x_nchw.shape
    Cout = weight_oihw.shape[0]
    assert H > PAD and W > PAD, "reflect padding (ReflectionPad2d) needs H, W > 3"

    Hp, Wp = H + 2 * PAD, W + 2 * PAD
    hw_out = H * Wp                              # output columns (padded width)
    per_kh = -(-(K * Cin) // 16) * 16            # per-kh row block, bf16-tile aligned
    ckk = K * per_kh                             # contraction depth incl. pad rows
    # Lane-pad the flattened spatial axis so every tap's lane shift stays
    # in-bounds (max shift (K-1)*Wp + K-1) and the HBM->VMEM DMA is lane-dense.
    max_shift = (K - 1) * Wp + (K - 1)
    ell = -(-max(Hp * Wp, hw_out + max_shift) // 128) * 128

    # Glue (layout plumbing only): reflect pad in NCHW, flatten spatial,
    # zero-pad lanes, cast MXU operands to bf16.
    x_pad = jnp.pad(x_nchw, ((0, 0), (0, 0), (PAD, PAD), (PAD, PAD)),
                    mode="reflect")
    x_flat = jnp.pad(x_pad.reshape(N, Cin, Hp * Wp),
                     ((0, 0), (0, 0), (0, ell - Hp * Wp))).astype(jnp.bfloat16)

    # Weight: OIHW -> rows ordered (kh, kw, cin); each kh block zero-padded to
    # per_kh rows, matching the kernel's patch-matrix row layout.
    w_r = jnp.transpose(weight_oihw, (0, 2, 3, 1)).reshape(Cout, K, K * Cin)
    w_r = jnp.pad(w_r, ((0, 0), (0, 0), (0, per_kh - K * Cin)))
    w_flat = w_r.reshape(Cout, ckk).astype(jnp.bfloat16)
    b2 = bias.reshape(Cout, 1).astype(jnp.float32)

    kernel = functools.partial(_conv7x7_kernel, wp=Wp)

    out_flat = pl.pallas_call(
        kernel,
        out_shape=jax.ShapeDtypeStruct((N, Cout, hw_out), x_nchw.dtype),
        grid_spec=pltpu.PrefetchScalarGridSpec(
            num_scalar_prefetch=0,
            grid=(N,),
            in_specs=[
                pl.BlockSpec((1, Cin, ell), lambda n: (n, 0, 0)),
                pl.BlockSpec((Cout, ckk), lambda n: (0, 0)),
                pl.BlockSpec((Cout, 1), lambda n: (0, 0)),
            ],
            out_specs=pl.BlockSpec((1, Cout, hw_out), lambda n: (n, 0, 0)),
            scratch_shapes=[pltpu.VMEM((ckk, hw_out), jnp.bfloat16)],
        ),
        compiler_params=pltpu.CompilerParams(
            dimension_semantics=("parallel",),
            vmem_limit_bytes=32 * 1024 * 1024,
        ),
    )(x_flat, w_flat, b2)

    # (N, Cout, H, Wp): drop the Wp-W garbage columns -> NCHW output.
    return out_flat.reshape(N, Cout, H, Wp)[:, :, :, :W]


def _reference(x_nchw, weight_oihw, bias):
    """Pure-JAX f32 reference (reflect pad + VALID conv)."""
    x_nhwc = jnp.transpose(x_nchw, (0, 2, 3, 1))
    x_pad = jnp.pad(x_nhwc, ((0, 0), (PAD, PAD), (PAD, PAD), (0, 0)),
                    mode="reflect")
    w_hwio = jnp.transpose(weight_oihw, (2, 3, 1, 0))
    out = jax.lax.conv_general_dilated(
        x_pad, w_hwio, window_strides=(1, 1), padding="VALID",
        dimension_numbers=("NHWC", "HWIO", "NHWC"))
    out = out + bias[None, None, None, :]
    return jnp.transpose(out, (0, 3, 1, 2))


if __name__ == "__main__":
    # Small shapes consistent with the module: batch=2, Cin=4, Cout=8, 16x16 spatial.
    N, Cin, Cout, H, W = 2, 4, 8, 16, 16

    key = jax.random.PRNGKey(0)
    kx, kw_, kb = jax.random.split(key, 3)

    x = jax.random.normal(kx, (N, Cin, H, W), dtype=jnp.float32)
    # Deterministic synthetic parameters (PyTorch Conv2d shapes: OIHW weight, bias).
    fan_in = Cin * K * K
    bound = 1.0 / (fan_in ** 0.5)
    weight = jax.random.uniform(kw_, (Cout, Cin, K, K), dtype=jnp.float32,
                                minval=-bound, maxval=bound)
    bias = jax.random.uniform(kb, (Cout,), dtype=jnp.float32,
                              minval=-bound, maxval=bound)

    out = feature_map_block(x, weight, bias)
    out = jax.block_until_ready(out)

    ref = _reference(x, weight, bias)
    assert out.shape == (N, Cout, H, W)
    # bf16 MXU operands with f32 accumulation: relaxed tolerance vs f32 reference.
    assert jnp.allclose(out, ref, atol=2e-2, rtol=2e-2), "mismatch vs reference"

    print("KERNEL_OK")
</pallas_src>

<mosaic_0001>
module attributes {stable_mosaic.version = 11 : i64} {
  func.func @_conv7x7_kernel(%arg0: i32, %arg1: memref<1x4x512xbf16, #tpu.memory_space<vmem>>, %arg2: memref<8x224xbf16, #tpu.memory_space<vmem>>, %arg3: memref<8x1xf32, #tpu.memory_space<vmem>>, %arg4: memref<1x8x352xf32, #tpu.memory_space<vmem>>, %arg5: memref<224x352xbf16, #tpu.memory_space<vmem>>) attributes {dimension_semantics = [#tpu.dimension_semantics<parallel>], iteration_bounds = array<i64: 2>, scalar_prefetch = 0 : i64, scratch_operands = 1 : i64, tpu.core_type = #tpu.core_type<tc>, window_params = [{transform_indices = @transform_0, window_bounds = array<i64: 1, 4, 512>}, {pipeline_mode = #tpu.pipeline_mode<synchronous>, transform_indices = @transform_1, window_bounds = array<i64: 8, 224>}, {pipeline_mode = #tpu.pipeline_mode<synchronous>, transform_indices = @transform_2, window_bounds = array<i64: 8, 1>}, {transform_indices = @transform_3, window_bounds = array<i64: 1, 8, 352>}]} {
    %c0 = arith.constant 0 : index
    %c0_0 = arith.constant 0 : index
    %c0_1 = arith.constant 0 : index
    %0 = vector.load %arg1[%c0, %c0_0, %c0_1] : memref<1x4x512xbf16, #tpu.memory_space<vmem>>, vector<1x4x512xbf16>
    %1 = vector.shape_cast %0 : vector<1x4x512xbf16> to vector<4x512xbf16>
    %2 = vector.extract_strided_slice %1 {offsets = [0, 0], sizes = [4, 352], strides = [1, 1]} : vector<4x512xbf16> to vector<4x352xbf16>
    %3 = vector.extract_strided_slice %1 {offsets = [0, 1], sizes = [4, 352], strides = [1, 1]} : vector<4x512xbf16> to vector<4x352xbf16>
    %4 = vector.extract_strided_slice %1 {offsets = [0, 2], sizes = [4, 352], strides = [1, 1]} : vector<4x512xbf16> to vector<4x352xbf16>
    %5 = vector.extract_strided_slice %1 {offsets = [0, 3], sizes = [4, 352], strides = [1, 1]} : vector<4x512xbf16> to vector<4x352xbf16>
    %6 = vector.extract_strided_slice %1 {offsets = [0, 4], sizes = [4, 352], strides = [1, 1]} : vector<4x512xbf16> to vector<4x352xbf16>
    %7 = vector.extract_strided_slice %1 {offsets = [0, 5], sizes = [4, 352], strides = [1, 1]} : vector<4x512xbf16> to vector<4x352xbf16>
    %8 = vector.extract_strided_slice %1 {offsets = [0, 6], sizes = [4, 352], strides = [1, 1]} : vector<4x512xbf16> to vector<4x352xbf16>
    %cst = arith.constant 0.000000e+00 : bf16
    %9 = vector.broadcast %cst : bf16 to vector<4x352xbf16>
    %10 = tpu.concatenate %2, %3, %4, %5, %6, %7, %8, %9 in 0 : vector<4x352xbf16>, vector<4x352xbf16>, vector<4x352xbf16>, vector<4x352xbf16>, vector<4x352xbf16>, vector<4x352xbf16>, vector<4x352xbf16>, vector<4x352xbf16> -> vector<32x352xbf16>
    %c0_2 = arith.constant 0 : index
    %c0_3 = arith.constant 0 : index
    %11 = vector.load %arg5[%c0_2, %c0_3] : memref<224x352xbf16, #tpu.memory_space<vmem>>, vector<32x352xbf16>
    tpu.vector_store %arg5[%c0_2, %c0_3], %10 {strides = array<i32>} : memref<224x352xbf16, #tpu.memory_space<vmem>>, vector<32x352xbf16>,
    %12 = vector.extract_strided_slice %1 {offsets = [0, 22], sizes = [4, 352], strides = [1, 1]} : vector<4x512xbf16> to vector<4x352xbf16>
    %13 = vector.extract_strided_slice %1 {offsets = [0, 23], sizes = [4, 352], strides = [1, 1]} : vector<4x512xbf16> to vector<4x352xbf16>
    %14 = vector.extract_strided_slice %1 {offsets = [0, 24], sizes = [4, 352], strides = [1, 1]} : vector<4x512xbf16> to vector<4x352xbf16>
    %15 = vector.extract_strided_slice %1 {offsets = [0, 25], sizes = [4, 352], strides = [1, 1]} : vector<4x512xbf16> to vector<4x352xbf16>
    %16 = vector.extract_strided_slice %1 {offsets = [0, 26], sizes = [4, 352], strides = [1, 1]} : vector<4x512xbf16> to vector<4x352xbf16>
    %17 = vector.extract_strided_slice %1 {offsets = [0, 27], sizes = [4, 352], strides = [1, 1]} : vector<4x512xbf16> to vector<4x352xbf16>
    %18 = vector.extract_strided_slice %1 {offsets = [0, 28], sizes = [4, 352], strides = [1, 1]} : vector<4x512xbf16> to vector<4x352xbf16>
    %cst_4 = arith.constant 0.000000e+00 : bf16
    %19 = vector.broadcast %cst_4 : bf16 to vector<4x352xbf16>
    %20 = tpu.concatenate %12, %13, %14, %15, %16, %17, %18, %19 in 0 : vector<4x352xbf16>, vector<4x352xbf16>, vector<4x352xbf16>, vector<4x352xbf16>, vector<4x352xbf16>, vector<4x352xbf16>, vector<4x352xbf16>, vector<4x352xbf16> -> vector<32x352xbf16>
    %c32 = arith.constant 32 : index
    %c0_5 = arith.constant 0 : index
    %21 = vector.load %arg5[%c32, %c0_5] : memref<224x352xbf16, #tpu.memory_space<vmem>>, vector<32x352xbf16>
    tpu.vector_store %arg5[%c32, %c0_5], %20 {strides = array<i32>} : memref<224x352xbf16, #tpu.memory_space<vmem>>, vector<32x352xbf16>,
    %22 = vector.extract_strided_slice %1 {offsets = [0, 44], sizes = [4, 352], strides = [1, 1]} : vector<4x512xbf16> to vector<4x352xbf16>
    %23 = vector.extract_strided_slice %1 {offsets = [0, 45], sizes = [4, 352], strides = [1, 1]} : vector<4x512xbf16> to vector<4x352xbf16>
    %24 = vector.extract_strided_slice %1 {offsets = [0, 46], sizes = [4, 352], strides = [1, 1]} : vector<4x512xbf16> to vector<4x352xbf16>
    %25 = vector.extract_strided_slice %1 {offsets = [0, 47], sizes = [4, 352], strides = [1, 1]} : vector<4x512xbf16> to vector<4x352xbf16>
    %26 = vector.extract_strided_slice %1 {offsets = [0, 48], sizes = [4, 352], strides = [1, 1]} : vector<4x512xbf16> to vector<4x352xbf16>
    %27 = vector.extract_strided_slice %1 {offsets = [0, 49], sizes = [4, 352], strides = [1, 1]} : vector<4x512xbf16> to vector<4x352xbf16>
    %28 = vector.extract_strided_slice %1 {offsets = [0, 50], sizes = [4, 352], strides = [1, 1]} : vector<4x512xbf16> to vector<4x352xbf16>
    %cst_6 = arith.constant 0.000000e+00 : bf16
    %29 = vector.broadcast %cst_6 : bf16 to vector<4x352xbf16>
    %30 = tpu.concatenate %22, %23, %24, %25, %26, %27, %28, %29 in 0 : vector<4x352xbf16>, vector<4x352xbf16>, vector<4x352xbf16>, vector<4x352xbf16>, vector<4x352xbf16>, vector<4x352xbf16>, vector<4x352xbf16>, vector<4x352xbf16> -> vector<32x352xbf16>
    %c64 = arith.constant 64 : index
    %c0_7 = arith.constant 0 : index
    %31 = vector.load %arg5[%c64, %c0_7] : memref<224x352xbf16, #tpu.memory_space<vmem>>, vector<32x352xbf16>
    tpu.vector_store %arg5[%c64, %c0_7], %30 {strides = array<i32>} : memref<224x352xbf16, #tpu.memory_space<vmem>>, vector<32x352xbf16>,
    %32 = vector.extract_strided_slice %1 {offsets = [0, 66], sizes = [4, 352], strides = [1, 1]} : vector<4x512xbf16> to vector<4x352xbf16>
    %33 = vector.extract_strided_slice %1 {offsets = [0, 67], sizes = [4, 352], strides = [1, 1]} : vector<4x512xbf16> to vector<4x352xbf16>
    %34 = vector.extract_strided_slice %1 {offsets = [0, 68], sizes = [4, 352], strides = [1, 1]} : vector<4x512xbf16> to vector<4x352xbf16>
    %35 = vector.extract_strided_slice %1 {offsets = [0, 69], sizes = [4, 352], strides = [1, 1]} : vector<4x512xbf16> to vector<4x352xbf16>
    %36 = vector.extract_strided_slice %1 {offsets = [0, 70], sizes = [4, 352], strides = [1, 1]} : vector<4x512xbf16> to vector<4x352xbf16>
    %37 = vector.extract_strided_slice %1 {offsets = [0, 71], sizes = [4, 352], strides = [1, 1]} : vector<4x512xbf16> to vector<4x352xbf16>
    %38 = vector.extract_strided_slice %1 {offsets = [0, 72], sizes = [4, 352], strides = [1, 1]} : vector<4x512xbf16> to vector<4x352xbf16>
    %cst_8 = arith.constant 0.000000e+00 : bf16
    %39 = vector.broadcast %cst_8 : bf16 to vector<4x352xbf16>
    %40 = tpu.concatenate %32, %33, %34, %35, %36, %37, %38, %39 in 0 : vector<4x352xbf16>, vector<4x352xbf16>, vector<4x352xbf16>, vector<4x352xbf16>, vector<4x352xbf16>, vector<4x352xbf16>, vector<4x352xbf16>, vector<4x352xbf16> -> vector<32x352xbf16>
    %c96 = arith.constant 96 : index
    %c0_9 = arith.constant 0 : index
    %41 = vector.load %arg5[%c96, %c0_9] : memref<224x352xbf16, #tpu.memory_space<vmem>>, vector<32x352xbf16>
    tpu.vector_store %arg5[%c96, %c0_9], %40 {strides = array<i32>} : memref<224x352xbf16, #tpu.memory_space<vmem>>, vector<32x352xbf16>,
    %42 = vector.extract_strided_slice %1 {offsets = [0, 88], sizes = [4, 352], strides = [1, 1]} : vector<4x512xbf16> to vector<4x352xbf16>
    %43 = vector.extract_strided_slice %1 {offsets = [0, 89], sizes = [4, 352], strides = [1, 1]} : vector<4x512xbf16> to vector<4x352xbf16>
    %44 = vector.extract_strided_slice %1 {offsets = [0, 90], sizes = [4, 352], strides = [1, 1]} : vector<4x512xbf16> to vector<4x352xbf16>
    %45 = vector.extract_strided_slice %1 {offsets = [0, 91], sizes = [4, 352], strides = [1, 1]} : vector<4x512xbf16> to vector<4x352xbf16>
    %46 = vector.extract_strided_slice %1 {offsets = [0, 92], sizes = [4, 352], strides = [1, 1]} : vector<4x512xbf16> to vector<4x352xbf16>
    %47 = vector.extract_strided_slice %1 {offsets = [0, 93], sizes = [4, 352], strides = [1, 1]} : vector<4x512xbf16> to vector<4x352xbf16>
    %48 = vector.extract_strided_slice %1 {offsets = [0, 94], sizes = [4, 352], strides = [1, 1]} : vector<4x512xbf16> to vector<4x352xbf16>
    %cst_10 = arith.constant 0.000000e+00 : bf16
    %49 = vector.broadcast %cst_10 : bf16 to vector<4x352xbf16>
    %50 = tpu.concatenate %42, %43, %44, %45, %46, %47, %48, %49 in 0 : vector<4x352xbf16>, vector<4x352xbf16>, vector<4x352xbf16>, vector<4x352xbf16>, vector<4x352xbf16>, vector<4x352xbf16>, vector<4x352xbf16>, vector<4x352xbf16> -> vector<32x352xbf16>
    %c128 = arith.constant 128 : index
    %c0_11 = arith.constant 0 : index
    %51 = vector.load %arg5[%c128, %c0_11] : memref<224x352xbf16, #tpu.memory_space<vmem>>, vector<32x352xbf16>
    tpu.vector_store %arg5[%c128, %c0_11], %50 {strides = array<i32>} : memref<224x352xbf16, #tpu.memory_space<vmem>>, vector<32x352xbf16>,
    %52 = vector.extract_strided_slice %1 {offsets = [0, 110], sizes = [4, 352], strides = [1, 1]} : vector<4x512xbf16> to vector<4x352xbf16>
    %53 = vector.extract_strided_slice %1 {offsets = [0, 111], sizes = [4, 352], strides = [1, 1]} : vector<4x512xbf16> to vector<4x352xbf16>
    %54 = vector.extract_strided_slice %1 {offsets = [0, 112], sizes = [4, 352], strides = [1, 1]} : vector<4x512xbf16> to vector<4x352xbf16>
    %55 = vector.extract_strided_slice %1 {offsets = [0, 113], sizes = [4, 352], strides = [1, 1]} : vector<4x512xbf16> to vector<4x352xbf16>
    %56 = vector.extract_strided_slice %1 {offsets = [0, 114], sizes = [4, 352], strides = [1, 1]} : vector<4x512xbf16> to vector<4x352xbf16>
    %57 = vector.extract_strided_slice %1 {offsets = [0, 115], sizes = [4, 352], strides = [1, 1]} : vector<4x512xbf16> to vector<4x352xbf16>
    %58 = vector.extract_strided_slice %1 {offsets = [0, 116], sizes = [4, 352], strides = [1, 1]} : vector<4x512xbf16> to vector<4x352xbf16>
    %cst_12 = arith.constant 0.000000e+00 : bf16
    %59 = vector.broadcast %cst_12 : bf16 to vector<4x352xbf16>
    %60 = tpu.concatenate %52, %53, %54, %55, %56, %57, %58, %59 in 0 : vector<4x352xbf16>, vector<4x352xbf16>, vector<4x352xbf16>, vector<4x352xbf16>, vector<4x352xbf16>, vector<4x352xbf16>, vector<4x352xbf16>, vector<4x352xbf16> -> vector<32x352xbf16>
    %c160 = arith.constant 160 : index
    %c0_13 = arith.constant 0 : index
    %61 = vector.load %arg5[%c160, %c0_13] : memref<224x352xbf16, #tpu.memory_space<vmem>>, vector<32x352xbf16>
    tpu.vector_store %arg5[%c160, %c0_13], %60 {strides = array<i32>} : memref<224x352xbf16, #tpu.memory_space<vmem>>, vector<32x352xbf16>,
    %62 = vector.extract_strided_slice %1 {offsets = [0, 132], sizes = [4, 352], strides = [1, 1]} : vector<4x512xbf16> to vector<4x352xbf16>
    %63 = vector.extract_strided_slice %1 {offsets = [0, 133], sizes = [4, 352], strides = [1, 1]} : vector<4x512xbf16> to vector<4x352xbf16>
    %64 = vector.extract_strided_slice %1 {offsets = [0, 134], sizes = [4, 352], strides = [1, 1]} : vector<4x512xbf16> to vector<4x352xbf16>
    %65 = vector.extract_strided_slice %1 {offsets = [0, 135], sizes = [4, 352], strides = [1, 1]} : vector<4x512xbf16> to vector<4x352xbf16>
    %66 = vector.extract_strided_slice %1 {offsets = [0, 136], sizes = [4, 352], strides = [1, 1]} : vector<4x512xbf16> to vector<4x352xbf16>
    %67 = vector.extract_strided_slice %1 {offsets = [0, 137], sizes = [4, 352], strides = [1, 1]} : vector<4x512xbf16> to vector<4x352xbf16>
    %68 = vector.extract_strided_slice %1 {offsets = [0, 138], sizes = [4, 352], strides = [1, 1]} : vector<4x512xbf16> to vector<4x352xbf16>
    %cst_14 = arith.constant 0.000000e+00 : bf16
    %69 = vector.broadcast %cst_14 : bf16 to vector<4x352xbf16>
    %70 = tpu.concatenate %62, %63, %64, %65, %66, %67, %68, %69 in 0 : vector<4x352xbf16>, vector<4x352xbf16>, vector<4x352xbf16>, vector<4x352xbf16>, vector<4x352xbf16>, vector<4x352xbf16>, vector<4x352xbf16>, vector<4x352xbf16> -> vector<32x352xbf16>
    %c192 = arith.constant 192 : index
    %c0_15 = arith.constant 0 : index
    %71 = vector.load %arg5[%c192, %c0_15] : memref<224x352xbf16, #tpu.memory_space<vmem>>, vector<32x352xbf16>
    tpu.vector_store %arg5[%c192, %c0_15], %70 {strides = array<i32>} : memref<224x352xbf16, #tpu.memory_space<vmem>>, vector<32x352xbf16>,
    %c0_16 = arith.constant 0 : index
    %c0_17 = arith.constant 0 : index
    %72 = vector.load %arg2[%c0_16, %c0_17] : memref<8x224xbf16, #tpu.memory_space<vmem>>, vector<8x224xbf16>
    %c0_18 = arith.constant 0 : index
    %c0_19 = arith.constant 0 : index
    %73 = vector.load %arg5[%c0_18, %c0_19] : memref<224x352xbf16, #tpu.memory_space<vmem>>, vector<224x352xbf16>
    %cst_20 = arith.constant dense<0.000000e+00> : vector<8x352xf32>
    %74 = tpu.matmul %72, %73, %cst_20 {dimension_numbers = #tpu.dot_dimension_numbers<[1], [0], [0], [1], [0, 0, 1, 1], [], []>} : vector<8x224xbf16>, vector<224x352xbf16>, vector<8x352xf32> -> vector<8x352xf32>
    %c0_21 = arith.constant 0 : index
    %c0_22 = arith.constant 0 : index
    %75 = vector.load %arg3[%c0_21, %c0_22] : memref<8x1xf32, #tpu.memory_space<vmem>>, vector<8x1xf32>
    %76 = vector.broadcast %75 : vector<8x1xf32> to vector<8x352xf32>
    %77 = arith.addf %74, %76 : vector<8x352xf32>
    %78 = vector.shape_cast %77 : vector<8x352xf32> to vector<1x8x352xf32>
    %c0_23 = arith.constant 0 : index
    %c0_24 = arith.constant 0 : index
    %c0_25 = arith.constant 0 : index
    %79 = vector.load %arg4[%c0_23, %c0_24, %c0_25] : memref<1x8x352xf32, #tpu.memory_space<vmem>>, vector<1x8x352xf32>
    tpu.vector_store %arg4[%c0_23, %c0_24, %c0_25], %78 {strides = array<i32>} : memref<1x8x352xf32, #tpu.memory_space<vmem>>, vector<1x8x352xf32>,
    return
  }
  func.func @transform_0(%arg0: i32) -> (i32, i32, i32) {
    %c0_i32 = arith.constant 0 : i32
    %c0_i32_0 = arith.constant 0 : i32
    %c0_i32_1 = arith.constant 0 : i32
    return %arg0, %c0_i32, %c0_i32_0 : i32, i32, i32
  }
  func.func @transform_1(%arg0: i32) -> (i32, i32) {
    %c0_i32 = arith.constant 0 : i32
    %c0_i32_0 = arith.constant 0 : i32
    %c0_i32_1 = arith.constant 0 : i32
    return %c0_i32, %c0_i32_0 : i32, i32
  }
  func.func @transform_2(%arg0: i32) -> (i32, i32) {
    %c0_i32 = arith.constant 0 : i32
    %c0_i32_0 = arith.constant 0 : i32
    %c0_i32_1 = arith.constant 0 : i32
    return %c0_i32, %c0_i32_0 : i32, i32
  }
  func.func @transform_3(%arg0: i32) -> (i32, i32, i32) {
    %c0_i32 = arith.constant 0 : i32
    %c0_i32_0 = arith.constant 0 : i32
    %c0_i32_1 = arith.constant 0 : i32
    return %arg0, %c0_i32, %c0_i32_0 : i32, i32, i32
  }
}

</mosaic_0001>

<llo_original>
// kernel: tpu_custom_call.1
$region0: #{tpu_custom_call.1}
  #allocation0 [shape = 'u32[]', space=smem, size = 0x4, offset = 0x4, fixed_abs, tag = 'smem constant byte address 0x4 - core index']
  #allocation1 [shape = 'u32[144,128]{1,0:T(1,128)}', space=vmem, size = 0x12000, scoped, tag = 'internal scratch']
  #allocation2 [shape = 'bf16[224,352]{1,0:T(8,128)(2,1)}', space=vmem, size = 0x2a000, scoped, tag = 'scratch operand']
  %s0 = inlined_call_operand.hbm [shape: bf16[2,4,512], index: 0, kind: input, shape index: {}]
  %s1 = inlined_call_operand.vmem [shape: bf16[8,224], index: 1, kind: input, shape index: {}]
  %s2 = inlined_call_operand.vmem [shape: f32[8,1], index: 2, kind: input, shape index: {}]
  %s3 = inlined_call_operand.hbm [shape: f32[2,8,352], index: 3, kind: output, shape index: {}]
  %s4 = sld [smem:[#allocation0]]
  $region49: #{tpu_custom_call.1} parent=0
    _
  %s6 = ssub.s32 1, %s4
  %s7 = scalar_select 0, %s6, %s4
  $region1: #{tpu_custom_call.1} parent=0
    #allocation3 [shape = 'u8[8192]{0}', space=vmem, size = 0x2000, scoped, tag = 'input window, operand 0']
    #allocation4 [shape = 's32[2]{0}', space=sflag, size = 0x8, scoped, tag = 'scoped memory for tpu_custom_call.1']
    #allocation5 [shape = 's32[2]{0}', space=sflag, size = 0x8, scoped, tag = 'scoped memory for tpu_custom_call.1']
    #allocation6 [shape = 'u8[24576]{0}', space=vmem, size = 0x6000, scoped, tag = 'output window, operand 0']
    %8 = vsyncpa [#allocation4], 0
    %s9 = scalar_lea.sflag [#allocation4], 1
    %10 = vsyncpa %s9, 0
    %11 = vsyncpa [#allocation5], 0
    %s12 = scalar_lea.sflag [#allocation5], 1
    %13 = vsyncpa %s12, 0
    loop: start=0, step=1, limit=4
    $region2: #{tpu_custom_call.1} parent=1 // loop_pre_header
      _
    $region3: #{tpu_custom_call.1} parent=1 // loop_header
      %s15 = sphi 0, %s19
      %p16 = scmp.ge.s32.totalorder %s15, 4
      %s25 = sphi 0, %s27
      %s28 = sphi 0, %s25
      %s29 = sphi 0, %s28
      %s45 = sphi 0, %s29
      %s49 = sphi 0, %s49
      %s51 = sphi 0, %s49
      %s52 = sphi 0, %s51
      %s66 = sphi 0, %s52
      %s70 = sphi 0, %s70
      %s72 = sphi 0, %s70
      %s73 = sphi 0, %s72
      %s87 = sphi 0, %s73
      %s93 = sphi 0, %s95
      %s96 = sphi 0, %s93
      %s97 = sphi 0, %s96
      %s113 = sphi 0, %s97
    $region4: #{tpu_custom_call.1} parent=1 // loop_header_branch
      %18 = sbr.rel (%p16) target = $region8
    $region5: #{tpu_custom_call.1} parent=1 // loop_body
      %s20 = ssub.s32 %s15, 1
      %s21 = ssub.s32 %s15, 2
      %s22 = sadd.s32 %s15, 1
      %s23 = ssub.s32 %s15, %s22
      %p24 = scmp.eq.s32.totalorder %s23, 0
      %s26 = sadd.s32 %s25, 1
      %s27 = scalar_select %p24, %s25, %s26
      %p30 = pneg %p24
      %p31 = scmp.eq.s32.totalorder %s15, 1
      %p32 = por %p30, %p31
      %p33 = scmp.ne.s32.totalorder %s25, %s28
      %p34 = scmp.eq.s32.totalorder %s15, 0
      %p35 = por %p33, %p34
      %p36 = scmp.ne.s32.totalorder %s25, %s28
      %p37 = scmp.eq.s32.totalorder %s20, 1
      %p38 = por %p36, %p37
      %p39 = scmp.ne.s32.totalorder %s28, %s29
      %p40 = scmp.eq.s32.totalorder %s20, 0
      %p41 = por %p39, %p40
      %p42 = scmp.ne.s32.totalorder %s28, %s29
      %p43 = scmp.eq.s32.totalorder %s21, 1
      %p44 = por %p42, %p43
      %p46 = scmp.ne.s32.totalorder %s29, %s45
      %p47 = scmp.eq.s32.totalorder %s21, 0
      %p48 = por %p46, %p47
      %s50 = sadd.s32 %s49, 1
      %p53 = scmp.eq.s32.totalorder %s15, 1
      %p54 = scmp.ne.s32.totalorder %s49, %s51
      %p55 = scmp.eq.s32.totalorder %s15, 0
      %p56 = por %p54, %p55
      %p57 = scmp.ne.s32.totalorder %s49, %s51
      %p58 = scmp.eq.s32.totalorder %s20, 1
      %p59 = por %p57, %p58
      %p60 = scmp.ne.s32.totalorder %s51, %s52
      %p61 = scmp.eq.s32.totalorder %s20, 0
      %p62 = por %p60, %p61
      %p63 = scmp.ne.s32.totalorder %s51, %s52
      %p64 = scmp.eq.s32.totalorder %s21, 1
      %p65 = por %p63, %p64
      %p67 = scmp.ne.s32.totalorder %s52, %s66
      %p68 = scmp.eq.s32.totalorder %s21, 0
      %p69 = por %p67, %p68
      %s71 = sadd.s32 %s70, 1
      %p74 = scmp.eq.s32.totalorder %s15, 1
      %p75 = scmp.ne.s32.totalorder %s70, %s72
      %p76 = scmp.eq.s32.totalorder %s15, 0
      %p77 = por %p75, %p76
      %p78 = scmp.ne.s32.totalorder %s70, %s72
      %p79 = scmp.eq.s32.totalorder %s20, 1
      %p80 = por %p78, %p79
      %p81 = scmp.ne.s32.totalorder %s72, %s73
      %p82 = scmp.eq.s32.totalorder %s20, 0
      %p83 = por %p81, %p82
      %p84 = scmp.ne.s32.totalorder %s72, %s73
      %p85 = scmp.eq.s32.totalorder %s21, 1
      %p86 = por %p84, %p85
      %p88 = scmp.ne.s32.totalorder %s73, %s87
      %p89 = scmp.eq.s32.totalorder %s21, 0
      %p90 = por %p88, %p89
      %s91 = ssub.s32 %s15, %s22
      %p92 = scmp.eq.s32.totalorder %s91, 0
      %s94 = sadd.s32 %s93, 1
      %s95 = scalar_select %p92, %s93, %s94
      %p98 = pneg %p92
      %p99 = scmp.eq.s32.totalorder %s15, 1
      %p100 = por %p98, %p99
      %p101 = scmp.ne.s32.totalorder %s93, %s96
      %p102 = scmp.eq.s32.totalorder %s15, 0
      %p103 = por %p101, %p102
      %p104 = scmp.ne.s32.totalorder %s93, %s96
      %p105 = scmp.eq.s32.totalorder %s20, 1
      %p106 = por %p104, %p105
      %p107 = scmp.ne.s32.totalorder %s96, %s97
      %p108 = scmp.eq.s32.totalorder %s20, 0
      %p109 = por %p107, %p108
      %p110 = scmp.ne.s32.totalorder %s96, %s97
      %p111 = scmp.eq.s32.totalorder %s21, 1
      %p112 = por %p110, %p111
      %p114 = scmp.ne.s32.totalorder %s97, %s113
      %p115 = scmp.eq.s32.totalorder %s21, 0
      %p116 = por %p114, %p115
      %p117 = scmp.le.s32.totalorder 1, %s15
      %p118 = scmp.lt.s32.totalorder %s15, 3
      %p119 = pnand %p117, %p118
      %p120 = pneg %p119
      // Predicated region
      $region9: #{tpu_custom_call.1} parent=5 // pred_check
        _
      $region10: #{tpu_custom_call.1} parent=5 // pred_check_branch
        %122 = sbr.rel (%p119) target = $region12
      $region11: #{tpu_custom_call.1} parent=5 // pred_region
        %s123 = ssub.s32 %s15, 1
        // Predicated region
        $region13: #{tpu_custom_call.1} parent=11 // pred_check
          %p124 = pneg %p62
        $region14: #{tpu_custom_call.1} parent=11 // pred_check_branch
          %126 = sbr.rel (%p124) target = $region16
        $region15: #{tpu_custom_call.1} parent=11 // pred_region
          _
        $region16: #{tpu_custom_call.1} parent=11 // pred_fallthru
          _
        // Predicated region
        $region17: #{tpu_custom_call.1} parent=11 // pred_check
          %p127 = pneg %p83
        $region18: #{tpu_custom_call.1} parent=11 // pred_check_branch
          %129 = sbr.rel (%p127) target = $region20
        $region19: #{tpu_custom_call.1} parent=11 // pred_region
          _
        $region20: #{tpu_custom_call.1} parent=11 // pred_fallthru
          _
      $region12: #{tpu_custom_call.1} parent=5 // pred_fallthru
        _
      %p130 = scmp.lt.s32.totalorder %s15, 2
      // Predicated region
      $region21: #{tpu_custom_call.1} parent=5 // pred_check
        %p131 = pneg %p130
      $region22: #{tpu_custom_call.1} parent=5 // pred_check_branch
        %133 = sbr.rel (%p131) target = $region24
      $region23: #{tpu_custom_call.1} parent=5 // pred_region
        // Predicated region
        $region25: #{tpu_custom_call.1} parent=23 // pred_check
          %p134 = pneg %p35
        $region26: #{tpu_custom_call.1} parent=23 // pred_check_branch
          %136 = sbr.rel (%p134) target = $region28
        $region27: #{tpu_custom_call.1} parent=23 // pred_region
          %s137 = sand.u32 %s25, 1
          %s138 = scalar_lea.sflag [#allocation4], %s137
          %s139 = sand.u32 %s25, 1
          %s140 = smul.addr %s139, 8
          %s141 = scalar_lea.vmem [#allocation3], %s140
          %s143 = ssub.s32 128, 128
          %144 = vsyncadd %s138, %s143
          %s145 = smul.addr %s15, 4
          %s146 = smul.addr %s145, 32
          %s147 = scalar_lea.hbm %s0, %s146
          %s149 = sshll.u32 %s141, 4
          %s150 = int_to_ptr.vmem [resolvable:$true] %s149
          %152 = dma.hbm_to_vmem [thread:$0]  %s147, 128, %s150, %s138
        $region28: #{tpu_custom_call.1} parent=23 // pred_fallthru
          _
      $region24: #{tpu_custom_call.1} parent=5 // pred_fallthru
        _
      %p153 = scmp.le.s32.totalorder 1, %s15
      %p154 = scmp.lt.s32.totalorder %s15, 3
      %p155 = pnand %p153, %p154
      %p156 = pneg %p155
      // Predicated region
      $region29: #{tpu_custom_call.1} parent=5 // pred_check
        _
      $region30: #{tpu_custom_call.1} parent=5 // pred_check_branch
        %158 = sbr.rel (%p155) target = $region32
      $region31: #{tpu_custom_call.1} parent=5 // pred_region
        %s159 = ssub.s32 %s15, 1
        %s160 = sand.u32 %s28, 1
        %s161 = scalar_lea.sflag [#allocation4], %s160
        %s162 = sand.u32 %s28, 1
        %s163 = smul.addr %s162, 8
        %s164 = scalar_lea.vmem [#allocation3], %s163
        // Predicated region
        $region33: #{tpu_custom_call.1} parent=31 // pred_check
          %p165 = pneg %p41
        $region34: #{tpu_custom_call.1} parent=31 // pred_check_branch
          %167 = sbr.rel (%p165) target = $region36
        $region35: #{tpu_custom_call.1} parent=31 // pred_region
          %168 = dma.done %s161, 128
        $region36: #{tpu_custom_call.1} parent=31 // pred_fallthru
          _
        %s169 = sand.u32 %s28, 1
        %s170 = scalar_lea.sflag [#allocation4], %s169
        %s171 = sand.u32 %s28, 1
        %s172 = smul.addr %s171, 8
        %s173 = scalar_lea.vmem [#allocation3], %s172
        %p174 = pneg %p41
        %p175 = pneg %p38
        %p176 = pneg %p62
        %p177 = pneg %p59
        %p178 = pneg %p83
        %p179 = pneg %p80
        %p180 = pneg %p109
        %p181 = pneg %p106
        %s182 = sand.u32 %s96, 1
        %s183 = scalar_lea.sflag [#allocation5], %s182
        %s184 = sand.u32 %s96, 1
        %s185 = smul.addr %s184, 24
        %s186 = scalar_lea.vmem [#allocation6], %s185
        %v188 = vld [vmem:[%s164] sm:$0xff]
        %v190 = vcombine.high %v188, %v188
        %v192 = vunpack.c.l.s4 1983009808
        %v193 = vunpack.c.0.s8 %v192
        %v194 = vlaneseq
        %v195 = vshrl.u32 %v194, 7
        %v196 = vsub.s32 %v193, %v195
        %v197 = vrot.slane %v188, %v196
        %v199 = vunpack.c.l.s4 1983009808
        %v200 = vunpack.c.0.s8 %v199
        %v201 = vlaneseq
        %v202 = vshrl.u32 %v201, 7
        %v203 = vsub.s32 %v200, %v202
        %v204 = vrot.slane %v190, %v203
        %v205 = vcombine.high %v197, %v197
        %v206 = vcombine.low %v188, %v188
        %v208 = vunpack.c.l.s4 1983009808
        %v209 = vunpack.c.0.s8 %v208
        %v210 = vlaneseq
        %v211 = vshrl.u32 %v210, 7
        %v212 = vsub.s32 %v209, %v211
        %v213 = vrot.slane %v206, %v212
        %v214 = vcombine.high %v213, %v213
        %215 = vrot.lane.b32.xlu0 %v213, 127
        %v216 = vpop.permute.xlu0 %215
        %217 = vrot.lane.b32.xlu0 %v214, 127
        %v218 = vpop.permute.xlu0 %217
        %219 = vrot.lane.b32.xlu0 %v197, 127
        %v220 = vpop.permute.xlu0 %219
        %vm221 = vcmask 1039360
        %v222 = vsel %vm221, %v216, %v218
        %v223 = vsel %vm221, %v218, %v220
        %v224 = vcombine.low %v197, %v197
        %v225 = vcombine.low %v204, %v204
        %226 = vrot.lane.b32.xlu0 %v224, 126
        %v227 = vpop.permute.xlu0 %226
        %228 = vrot.lane.b32.xlu0 %v197, 126
        %v229 = vpop.permute.xlu0 %228
        %230 = vrot.lane.b32.xlu0 %v225, 126
        %v231 = vpop.permute.xlu0 %230
        %vm232 = vcmask 1031168
        %v233 = vsel %vm232, %v227, %v229
        %v234 = vsel %vm232, %v229, %v231
        %v235 = vcombine.low %v213, %v213
        %236 = vrot.lane.b32.xlu0 %v235, 125
        %v237 = vpop.permute.xlu0 %236
        %238 = vrot.lane.b32.xlu0 %v213, 125
        %v239 = vpop.permute.xlu0 %238
        %240 = vrot.lane.b32.xlu0 %v224, 125
        %v241 = vpop.permute.xlu0 %240
        %vm242 = vcmask 1022976
        %v243 = vsel %vm242, %v237, %v239
        %v244 = vsel %vm242, %v239, %v241
        %245 = vrot.lane.b32.xlu0 %v197, 124
        %v246 = vpop.permute.xlu0 %245
        %247 = vrot.lane.b32.xlu0 %v205, 124
        %v248 = vpop.permute.xlu0 %247
        %249 = vrot.lane.b32.xlu0 %v204, 124
        %v250 = vpop.permute.xlu0 %249
        %vm251 = vcmask 1014784
        %v252 = vsel %vm251, %v246, %v248
        %v253 = vsel %vm251, %v248, %v250
        %254 = vrot.lane.b32.xlu0 %v213, 123
        %v255 = vpop.permute.xlu0 %254
        %256 = vrot.lane.b32.xlu0 %v214, 123
        %v257 = vpop.permute.xlu0 %256
        %258 = vrot.lane.b32.xlu0 %v197, 123
        %v259 = vpop.permute.xlu0 %258
        %vm260 = vcmask 1006592
        %v261 = vsel %vm260, %v255, %v257
        %v262 = vsel %vm260, %v257, %v259
        %263 = vrot.lane.b32.xlu0 %v224, 122
        %v264 = vpop.permute.xlu0 %263
        %265 = vrot.lane.b32.xlu0 %v197, 122
        %v266 = vpop.permute.xlu0 %265
        %267 = vrot.lane.b32.xlu0 %v225, 122
        %v268 = vpop.permute.xlu0 %267
        %vm269 = vcmask 998400
        %v270 = vsel %vm269, %v264, %v266
        %v271 = vsel %vm269, %v266, %v268
        %vm272 = vcmask 1041408
        %v275 = vsel %vm272, %v197, %v222
        %v278 = vsel %vm272, %v205, %v223
        %v281 = vsel %vm272, %v204, %v220
        %vm282 = vcmask 1043456
        %v284 = vsel %vm282, %v275, %v233
        %v286 = vsel %vm282, %v278, %v234
        %v288 = vsel %vm282, %v281, %v231
        %vm289 = vcmask 1045504
        %v291 = vsel %vm289, %v284, %v243
        %v293 = vsel %vm289, %v286, %v244
        %v295 = vsel %vm289, %v288, %v241
        %v298 = vsel %vm272, %v252, %v261
        %v301 = vsel %vm272, %v253, %v262
        %v304 = vsel %vm272, %v250, %v259
        %v306 = vsel %vm282, %v298, %v270
        %v308 = vsel %vm282, %v301, %v271
        %v310 = vsel %vm282, %v304, %v268
        %v312 = vsel %vm289, %v306, 0
        %v313 = vsel %vm289, %v308, 0
        %v314 = vsel %vm289, %v310, 0
        %v321 = vunpack.c.l.b16 %v291
        %v322 = vunpack.c.l.b16 %v293
        %v323 = vunpack.c.l.b16 %v295
        %v324 = vunpack.c.h.b16 %v291
        %v325 = vunpack.c.h.b16 %v293
        %v326 = vunpack.c.h.b16 %v295
        %v327 = vunpack.c.l.b16 %v312
        %v328 = vunpack.c.l.b16 %v313
        %v329 = vunpack.c.l.b16 %v314
        %v330 = vunpack.c.h.b16 %v312
        %v331 = vunpack.c.h.b16 %v313
        %v332 = vunpack.c.h.b16 %v314
        %v333 = vpack.c.b16 %v322, %v321
        %v334 = vpack.c.b16 %v323, %v323
        %v335 = vpack.c.b16 %v325, %v324
        %v336 = vpack.c.b16 %v326, %v326
        %v337 = vpack.c.b16 %v328, %v327
        %v338 = vpack.c.b16 %v329, %v329
        %v339 = vpack.c.b16 %v331, %v330
        %v340 = vpack.c.b16 %v332, %v332
        %349 = vst [vmem:[#allocation2] sm:$0xff] %v333
        %vm350 = vcmask 781312
        %351 = vst.msk [vmem:[#allocation2 + $0x8] sm:$0xf] %vm350, %v334
        %352 = vst [vmem:[#allocation2 + $0xc] sm:$0xff] %v335
        %353 = vst.msk [vmem:[#allocation2 + $0x14] sm:$0xf] %vm350, %v336
        %354 = vst [vmem:[#allocation2 + $0x18] sm:$0xff] %v337
        %355 = vst.msk [vmem:[#allocation2 + $0x20] sm:$0xf] %vm350, %v338
        %356 = vst [vmem:[#allocation2 + $0x24] sm:$0xff] %v339
        %357 = vst.msk [vmem:[#allocation2 + $0x2c] sm:$0xf] %vm350, %v340
        %358 = vrot.lane.b32.xlu0 %v333, 106
        %v359 = vpop.permute.xlu0 %358
        %360 = vrot.lane.b32.xlu0 %v334, 106
        %v361 = vpop.permute.xlu0 %360
        %362 = vrot.lane.b32.xlu0 %v335, 106
        %v363 = vpop.permute.xlu0 %362
        %364 = vrot.lane.b32.xlu0 %v336, 106
        %v365 = vpop.permute.xlu0 %364
        %366 = vrot.lane.b32.xlu0 %v337, 106
        %v367 = vpop.permute.xlu0 %366
        %368 = vrot.lane.b32.xlu0 %v338, 106
        %v369 = vpop.permute.xlu0 %368
        %370 = vrot.lane.b32.xlu0 %v339, 106
        %v371 = vpop.permute.xlu0 %370
        %372 = vrot.lane.b32.xlu0 %v340, 106
        %v373 = vpop.permute.xlu0 %372
        %v374 = vrot.slane %v359, 4
        %v375 = vrot.slane %v361, 4
        %v376 = vrot.slane %v363, 4
        %v377 = vrot.slane %v365, 4
        %v378 = vrot.slane %v367, 4
        %v379 = vrot.slane %v369, 4
        %v380 = vrot.slane %v371, 4
        %v381 = vrot.slane %v373, 4
        %vm382 = vcmask 1043456
        %v383 = vsel %vm382, %v374, %v375
        %vm384 = vcmask 867328
        %v385 = vsel %vm384, %v359, %v383
        %v386 = vsel %vm382, %v376, %v377
        %v387 = vsel %vm384, %v363, %v386
        %v388 = vsel %vm382, %v378, %v379
        %v389 = vsel %vm384, %v367, %v388
        %v390 = vsel %vm382, %v380, %v381
        %v391 = vsel %vm384, %v371, %v390
        %400 = vst [vmem:[#allocation2 + $0x30] sm:$0xff] %v385
        %401 = vst.msk [vmem:[#allocation2 + $0x38] sm:$0xf] %vm350, %v361
        %402 = vst [vmem:[#allocation2 + $0x3c] sm:$0xff] %v387
        %403 = vst.msk [vmem:[#allocation2 + $0x44] sm:$0xf] %vm350, %v365
        %404 = vst [vmem:[#allocation2 + $0x48] sm:$0xff] %v389
        %405 = vst.msk [vmem:[#allocation2 + $0x50] sm:$0xf] %vm350, %v369
        %406 = vst [vmem:[#allocation2 + $0x54] sm:$0xff] %v391
        %407 = vst.msk [vmem:[#allocation2 + $0x5c] sm:$0xf] %vm350, %v373
        %v408 = vcombine.high %v204, %v204
        %409 = vrot.lane.b32.xlu0 %v205, 127
        %v410 = vpop.permute.xlu0 %409
        %v411 = vsel %vm221, %v220, %v410
        %412 = vrot.lane.b32.xlu0 %v204, 126
        %v413 = vpop.permute.xlu0 %412
        %v414 = vsel %vm232, %v231, %v413
        %415 = vrot.lane.b32.xlu0 %v197, 125
        %v416 = vpop.permute.xlu0 %415
        %v417 = vsel %vm242, %v241, %v416
        %418 = vrot.lane.b32.xlu0 %v408, 124
        %v419 = vpop.permute.xlu0 %418
        %v420 = vsel %vm251, %v250, %v419
        %421 = vrot.lane.b32.xlu0 %v205, 123
        %v422 = vpop.permute.xlu0 %421
        %v423 = vsel %vm260, %v259, %v422
        %424 = vrot.lane.b32.xlu0 %v204, 122
        %v425 = vpop.permute.xlu0 %424
        %v426 = vsel %vm269, %v268, %v425
        %v428 = vsel %vm272, %v204, %v411
        %v431 = vsel %vm272, %v408, %v410
        %v433 = vsel %vm282, %v428, %v414
        %v435 = vsel %vm282, %v431, %v413
        %v437 = vsel %vm289, %v433, %v417
        %v439 = vsel %vm289, %v435, %v416
        %v442 = vsel %vm272, %v420, %v423
        %v445 = vsel %vm272, %v419, %v422
        %v447 = vsel %vm282, %v442, %v426
        %v449 = vsel %vm282, %v445, %v425
        %v450 = vsel %vm289, %v447, 0
        %v451 = vsel %vm289, %v449, 0
        %v456 = vunpack.c.l.b16 %v437
        %v457 = vunpack.c.l.b16 %v439
        %v458 = vunpack.c.h.b16 %v437
        %v459 = vunpack.c.h.b16 %v439
        %v460 = vunpack.c.l.b16 %v450
        %v461 = vunpack.c.l.b16 %v451
        %v462 = vunpack.c.h.b16 %v450
        %v463 = vunpack.c.h.b16 %v451
        %v464 = vpack.c.b16 %v457, %v456
        %v465 = vpack.c.b16 %v459, %v458
        %v466 = vpack.c.b16 %v461, %v460
        %v467 = vpack.c.b16 %v463, %v462
        %468 = vrot.lane.b32.xlu0 %v333, 84
        %v469 = vpop.permute.xlu0 %468
        %470 = vrot.lane.b32.xlu0 %v464, 84
        %v471 = vpop.permute.xlu0 %470
        %472 = vrot.lane.b32.xlu0 %v335, 84
        %v473 = vpop.permute.xlu0 %472
        %474 = vrot.lane.b32.xlu0 %v465, 84
        %v475 = vpop.permute.xlu0 %474
        %476 = vrot.lane.b32.xlu0 %v337, 84
        %v477 = vpop.permute.xlu0 %476
        %478 = vrot.lane.b32.xlu0 %v466, 84
        %v479 = vpop.permute.xlu0 %478
        %480 = vrot.lane.b32.xlu0 %v339, 84
        %v481 = vpop.permute.xlu0 %480
        %482 = vrot.lane.b32.xlu0 %v467, 84
        %v483 = vpop.permute.xlu0 %482
        %v484 = vrot.slane %v469, 4
        %v485 = vrot.slane %v471, 4
        %v486 = vrot.slane %v473, 4
        %v487 = vrot.slane %v475, 4
        %v488 = vrot.slane %v477, 4
        %v489 = vrot.slane %v479, 4
        %v490 = vrot.slane %v481, 4
        %v491 = vrot.slane %v483, 4
        %v492 = vsel %vm382, %v484, %v485
        %vm493 = vcmask 687104
        %v494 = vsel %vm493, %v469, %v492
        %v495 = vsel %vm493, %v471, %v485
        %v496 = vsel %vm382, %v486, %v487
        %v497 = vsel %vm493, %v473, %v496
        %v498 = vsel %vm493, %v475, %v487
        %v499 = vsel %vm382, %v488, %v489
        %v500 = vsel %vm493, %v477, %v499
        %v501 = vsel %vm493, %v479, %v489
        %v502 = vsel %vm382, %v490, %v491
        %v503 = vsel %vm493, %v481, %v502
        %v504 = vsel %vm493, %v483, %v491
        %513 = vst [vmem:[#allocation2 + $0x60] sm:$0xff] %v494
        %514 = vst.msk [vmem:[#allocation2 + $0x68] sm:$0xf] %vm350, %v495
        %515 = vst [vmem:[#allocation2 + $0x6c] sm:$0xff] %v497
        %516 = vst.msk [vmem:[#allocation2 + $0x74] sm:$0xf] %vm350, %v498
        %517 = vst [vmem:[#allocation2 + $0x78] sm:$0xff] %v500
        %518 = vst.msk [vmem:[#allocation2 + $0x80] sm:$0xf] %vm350, %v501
        %519 = vst [vmem:[#allocation2 + $0x84] sm:$0xff] %v503
        %520 = vst.msk [vmem:[#allocation2 + $0x8c] sm:$0xf] %vm350, %v504
        %521 = vrot.lane.b32.xlu0 %v333, 62
        %v522 = vpop.permute.xlu0 %521
        %523 = vrot.lane.b32.xlu0 %v464, 62
        %v524 = vpop.permute.xlu0 %523
        %525 = vrot.lane.b32.xlu0 %v335, 62
        %v526 = vpop.permute.xlu0 %525
        %527 = vrot.lane.b32.xlu0 %v465, 62
        %v528 = vpop.permute.xlu0 %527
        %529 = vrot.lane.b32.xlu0 %v337, 62
        %v530 = vpop.permute.xlu0 %529
        %531 = vrot.lane.b32.xlu0 %v466, 62
        %v532 = vpop.permute.xlu0 %531
        %533 = vrot.lane.b32.xlu0 %v339, 62
        %v534 = vpop.permute.xlu0 %533
        %535 = vrot.lane.b32.xlu0 %v467, 62
        %v536 = vpop.permute.xlu0 %535
        %v537 = vrot.slane %v522, 4
        %v538 = vrot.slane %v524, 4
        %v539 = vrot.slane %v526, 4
        %v540 = vrot.slane %v528, 4
        %v541 = vrot.slane %v530, 4
        %v542 = vrot.slane %v532, 4
        %v543 = vrot.slane %v534, 4
        %v544 = vrot.slane %v536, 4
        %v545 = vsel %vm382, %v537, %v538
        %vm546 = vcmask 506880
        %v547 = vsel %vm546, %v522, %v545
        %v548 = vsel %vm546, %v524, %v538
        %v549 = vsel %vm382, %v539, %v540
        %v550 = vsel %vm546, %v526, %v549
        %v551 = vsel %vm546, %v528, %v540
        %v552 = vsel %vm382, %v541, %v542
        %v553 = vsel %vm546, %v530, %v552
        %v554 = vsel %vm546, %v532, %v542
        %v555 = vsel %vm382, %v543, %v544
        %v556 = vsel %vm546, %v534, %v555
        %v557 = vsel %vm546, %v536, %v544
        %566 = vst [vmem:[#allocation2 + $0x90] sm:$0xff] %v547
        %567 = vst.msk [vmem:[#allocation2 + $0x98] sm:$0xf] %vm350, %v548
        %568 = vst [vmem:[#allocation2 + $0x9c] sm:$0xff] %v550
        %569 = vst.msk [vmem:[#allocation2 + $0xa4] sm:$0xf] %vm350, %v551
        %570 = vst [vmem:[#allocation2 + $0xa8] sm:$0xff] %v553
        %571 = vst.msk [vmem:[#allocation2 + $0xb0] sm:$0xf] %vm350, %v554
        %572 = vst [vmem:[#allocation2 + $0xb4] sm:$0xff] %v556
        %573 = vst.msk [vmem:[#allocation2 + $0xbc] sm:$0xf] %vm350, %v557
        %574 = vrot.lane.b32.xlu0 %v333, 40
        %v575 = vpop.permute.xlu0 %574
        %576 = vrot.lane.b32.xlu0 %v464, 40
        %v577 = vpop.permute.xlu0 %576
        %578 = vrot.lane.b32.xlu0 %v335, 40
        %v579 = vpop.permute.xlu0 %578
        %580 = vrot.lane.b32.xlu0 %v465, 40
        %v581 = vpop.permute.xlu0 %580
        %582 = vrot.lane.b32.xlu0 %v337, 40
        %v583 = vpop.permute.xlu0 %582
        %584 = vrot.lane.b32.xlu0 %v466, 40
        %v585 = vpop.permute.xlu0 %584
        %586 = vrot.lane.b32.xlu0 %v339, 40
        %v587 = vpop.permute.xlu0 %586
        %588 = vrot.lane.b32.xlu0 %v467, 40
        %v589 = vpop.permute.xlu0 %588
        %v590 = vrot.slane %v575, 4
        %v591 = vrot.slane %v577, 4
        %v592 = vrot.slane %v579, 4
        %v593 = vrot.slane %v581, 4
        %v594 = vrot.slane %v583, 4
        %v595 = vrot.slane %v585, 4
        %v596 = vrot.slane %v587, 4
        %v597 = vrot.slane %v589, 4
        %v598 = vsel %vm382, %v590, %v591
        %vm599 = vcmask 326656
        %v600 = vsel %vm599, %v575, %v598
        %v601 = vsel %vm599, %v577, %v591
        %v602 = vsel %vm382, %v592, %v593
        %v603 = vsel %vm599, %v579, %v602
        %v604 = vsel %vm599, %v581, %v593
        %v605 = vsel %vm382, %v594, %v595
        %v606 = vsel %vm599, %v583, %v605
        %v607 = vsel %vm599, %v585, %v595
        %v608 = vsel %vm382, %v596, %v597
        %v609 = vsel %vm599, %v587, %v608
        %v610 = vsel %vm599, %v589, %v597
        %619 = vst [vmem:[#allocation2 + $0xc0] sm:$0xff] %v600
        %620 = vst.msk [vmem:[#allocation2 + $0xc8] sm:$0xf] %vm350, %v601
        %621 = vst [vmem:[#allocation2 + $0xcc] sm:$0xff] %v603
        %622 = vst.msk [vmem:[#allocation2 + $0xd4] sm:$0xf] %vm350, %v604
        %623 = vst [vmem:[#allocation2 + $0xd8] sm:$0xff] %v606
        %624 = vst.msk [vmem:[#allocation2 + $0xe0] sm:$0xf] %vm350, %v607
        %625 = vst [vmem:[#allocation2 + $0xe4] sm:$0xff] %v609
        %626 = vst.msk [vmem:[#allocation2 + $0xec] sm:$0xf] %vm350, %v610
        %627 = vrot.lane.b32.xlu0 %v333, 18
        %v628 = vpop.permute.xlu0 %627
        %629 = vrot.lane.b32.xlu0 %v464, 18
        %v630 = vpop.permute.xlu0 %629
        %631 = vrot.lane.b32.xlu0 %v335, 18
        %v632 = vpop.permute.xlu0 %631
        %633 = vrot.lane.b32.xlu0 %v465, 18
        %v634 = vpop.permute.xlu0 %633
        %635 = vrot.lane.b32.xlu0 %v337, 18
        %v636 = vpop.permute.xlu0 %635
        %637 = vrot.lane.b32.xlu0 %v466, 18
        %v638 = vpop.permute.xlu0 %637
        %639 = vrot.lane.b32.xlu0 %v339, 18
        %v640 = vpop.permute.xlu0 %639
        %641 = vrot.lane.b32.xlu0 %v467, 18
        %v642 = vpop.permute.xlu0 %641
        %v643 = vrot.slane %v628, 4
        %v644 = vrot.slane %v630, 4
        %v645 = vrot.slane %v632, 4
        %v646 = vrot.slane %v634, 4
        %v647 = vrot.slane %v636, 4
        %v648 = vrot.slane %v638, 4
        %v649 = vrot.slane %v640, 4
        %v650 = vrot.slane %v642, 4
        %v651 = vsel %vm382, %v643, %v644
        %vm652 = vcmask 146432
        %v653 = vsel %vm652, %v628, %v651
        %v654 = vsel %vm652, %v630, %v644
        %v655 = vsel %vm382, %v645, %v646
        %v656 = vsel %vm652, %v632, %v655
        %v657 = vsel %vm652, %v634, %v646
        %v658 = vsel %vm382, %v647, %v648
        %v659 = vsel %vm652, %v636, %v658
        %v660 = vsel %vm652, %v638, %v648
        %v661 = vsel %vm382, %v649, %v650
        %v662 = vsel %vm652, %v640, %v661
        %v663 = vsel %vm652, %v642, %v650
        %672 = vst [vmem:[#allocation2 + $0xf0] sm:$0xff] %v653
        %673 = vst.msk [vmem:[#allocation2 + $0xf8] sm:$0xf] %vm350, %v654
        %674 = vst [vmem:[#allocation2 + $0xfc] sm:$0xff] %v656
        %675 = vst.msk [vmem:[#allocation2 + $0x104] sm:$0xf] %vm350, %v657
        %676 = vst [vmem:[#allocation2 + $0x108] sm:$0xff] %v659
        %677 = vst.msk [vmem:[#allocation2 + $0x110] sm:$0xf] %vm350, %v660
        %678 = vst [vmem:[#allocation2 + $0x114] sm:$0xff] %v662
        %679 = vst.msk [vmem:[#allocation2 + $0x11c] sm:$0xf] %vm350, %v663
        %680 = vrot.lane.b32.xlu0 %v213, 121
        %v681 = vpop.permute.xlu0 %680
        %682 = vrot.lane.b32.xlu0 %v224, 121
        %v683 = vpop.permute.xlu0 %682
        %684 = vrot.lane.b32.xlu0 %v197, 121
        %v685 = vpop.permute.xlu0 %684
        %vm686 = vcmask 990208
        %v687 = vsel %vm686, %v681, %v683
        %v688 = vsel %vm686, %v683, %v685
        %689 = vrot.lane.b32.xlu0 %v205, 120
        %v690 = vpop.permute.xlu0 %689
        %691 = vrot.lane.b32.xlu0 %v204, 120
        %v692 = vpop.permute.xlu0 %691
        %693 = vrot.lane.b32.xlu0 %v408, 120
        %v694 = vpop.permute.xlu0 %693
        %vm695 = vcmask 982016
        %v696 = vsel %vm695, %v690, %v692
        %v697 = vsel %vm695, %v692, %v694
        %698 = vrot.lane.b32.xlu0 %v214, 119
        %v699 = vpop.permute.xlu0 %698
        %700 = vrot.lane.b32.xlu0 %v197, 119
        %v701 = vpop.permute.xlu0 %700
        %702 = vrot.lane.b32.xlu0 %v205, 119
        %v703 = vpop.permute.xlu0 %702
        %vm704 = vcmask 973824
        %v705 = vsel %vm704, %v699, %v701
        %v706 = vsel %vm704, %v701, %v703
        %707 = vrot.lane.b32.xlu0 %v197, 118
        %v708 = vpop.permute.xlu0 %707
        %709 = vrot.lane.b32.xlu0 %v225, 118
        %v710 = vpop.permute.xlu0 %709
        %711 = vrot.lane.b32.xlu0 %v204, 118
        %v712 = vpop.permute.xlu0 %711
        %vm713 = vcmask 965632
        %v714 = vsel %vm713, %v708, %v710
        %v715 = vsel %vm713, %v710, %v712
        %v717 = vsel %vm289, %v308, %v687
        %v719 = vsel %vm289, %v447, %v688
        %v721 = vsel %vm289, %v449, %v685
        %v724 = vsel %vm272, %v696, %v705
        %v727 = vsel %vm272, %v697, %v706
        %v730 = vsel %vm272, %v694, %v703
        %v732 = vsel %vm282, %v724, %v714
        %v734 = vsel %vm282, %v727, %v715
        %v736 = vsel %vm282, %v730, %v712
        %v737 = vsel %vm289, %v732, 0
        %v738 = vsel %vm289, %v734, 0
        %v739 = vsel %vm289, %v736, 0
        %v746 = vunpack.c.l.b16 %v717
        %v747 = vunpack.c.l.b16 %v719
        %v748 = vunpack.c.l.b16 %v721
        %v749 = vunpack.c.h.b16 %v717
        %v750 = vunpack.c.h.b16 %v719
        %v751 = vunpack.c.h.b16 %v721
        %v752 = vunpack.c.l.b16 %v737
        %v753 = vunpack.c.l.b16 %v738
        %v754 = vunpack.c.l.b16 %v739
        %v755 = vunpack.c.h.b16 %v737
        %v756 = vunpack.c.h.b16 %v738
        %v757 = vunpack.c.h.b16 %v739
        %v758 = vpack.c.b16 %v747, %v746
        %v759 = vpack.c.b16 %v748, %v748
        %v760 = vpack.c.b16 %v750, %v749
        %v761 = vpack.c.b16 %v751, %v751
        %v762 = vpack.c.b16 %v753, %v752
        %v763 = vpack.c.b16 %v754, %v754
        %v764 = vpack.c.b16 %v756, %v755
        %v765 = vpack.c.b16 %v757, %v757
        %774 = vst [vmem:[#allocation2 + $0x120] sm:$0xff] %v758
        %775 = vst.msk [vmem:[#allocation2 + $0x128] sm:$0xf] %vm350, %v759
        %776 = vst [vmem:[#allocation2 + $0x12c] sm:$0xff] %v760
        %777 = vst.msk [vmem:[#allocation2 + $0x134] sm:$0xf] %vm350, %v761
        %778 = vst [vmem:[#allocation2 + $0x138] sm:$0xff] %v762
        %779 = vst.msk [vmem:[#allocation2 + $0x140] sm:$0xf] %vm350, %v763
        %780 = vst [vmem:[#allocation2 + $0x144] sm:$0xff] %v764
        %781 = vst.msk [vmem:[#allocation2 + $0x14c] sm:$0xf] %vm350, %v765
        %v782 = vld [vmem:[%s1] sm:$0xff]
        %v783 = vld [vmem:[#allocation2] sm:$0xff]
        %v784 = vld [vmem:[#allocation2 + $0x8] sm:$0xf]
        %v785 = vld [vmem:[#allocation2 + $0xc] sm:$0xff]
        %v786 = vld [vmem:[#allocation2 + $0x14] sm:$0xf]
        %v787 = vld [vmem:[#allocation2 + $0x18] sm:$0xff]
        %v788 = vld [vmem:[#allocation2 + $0x20] sm:$0xf]
        %v789 = vld [vmem:[#allocation2 + $0x24] sm:$0xff]
        %v790 = vld [vmem:[#allocation2 + $0x2c] sm:$0xf]
        %v791 = vld [vmem:[#allocation2 + $0x30] sm:$0xff]
        %v792 = vld [vmem:[#allocation2 + $0x38] sm:$0xf]
        %v793 = vld [vmem:[#allocation2 + $0x3c] sm:$0xff]
        %v794 = vld [vmem:[#allocation2 + $0x44] sm:$0xf]
        %v795 = vld [vmem:[#allocation2 + $0x48] sm:$0xff]
        %v796 = vld [vmem:[#allocation2 + $0x50] sm:$0xf]
        %v797 = vld [vmem:[#allocation2 + $0x54] sm:$0xff]
        %v798 = vld [vmem:[#allocation2 + $0x5c] sm:$0xf]
        %v799 = vld [vmem:[#allocation2 + $0x60] sm:$0xff]
        %v800 = vld [vmem:[#allocation2 + $0x68] sm:$0xf]
        %v801 = vld [vmem:[#allocation2 + $0x6c] sm:$0xff]
        %v802 = vld [vmem:[#allocation2 + $0x74] sm:$0xf]
        %v803 = vld [vmem:[#allocation2 + $0x78] sm:$0xff]
        %v804 = vld [vmem:[#allocation2 + $0x80] sm:$0xf]
        %v805 = vld [vmem:[#allocation2 + $0x84] sm:$0xff]
        %v806 = vld [vmem:[#allocation2 + $0x8c] sm:$0xf]
        %v807 = vld [vmem:[#allocation2 + $0x90] sm:$0xff]
        %v808 = vld [vmem:[#allocation2 + $0x98] sm:$0xf]
        %v809 = vld [vmem:[#allocation2 + $0x9c] sm:$0xff]
        %v810 = vld [vmem:[#allocation2 + $0xa4] sm:$0xf]
        %v811 = vld [vmem:[#allocation2 + $0xa8] sm:$0xff]
        %v812 = vld [vmem:[#allocation2 + $0xb0] sm:$0xf]
        %v813 = vld [vmem:[#allocation2 + $0xb4] sm:$0xff]
        %v814 = vld [vmem:[#allocation2 + $0xbc] sm:$0xf]
        %v815 = vld [vmem:[#allocation2 + $0xc0] sm:$0xff]
        %v816 = vld [vmem:[#allocation2 + $0xc8] sm:$0xf]
        %v817 = vld [vmem:[#allocation2 + $0xcc] sm:$0xff]
        %v818 = vld [vmem:[#allocation2 + $0xd4] sm:$0xf]
        %v819 = vld [vmem:[#allocation2 + $0xd8] sm:$0xff]
        %v820 = vld [vmem:[#allocation2 + $0xe0] sm:$0xf]
        %v821 = vld [vmem:[#allocation2 + $0xe4] sm:$0xff]
        %v822 = vld [vmem:[#allocation2 + $0xec] sm:$0xf]
        %v823 = vld [vmem:[#allocation2 + $0xf0] sm:$0xff]
        %v824 = vld [vmem:[#allocation2 + $0xf8] sm:$0xf]
        %v825 = vld [vmem:[#allocation2 + $0xfc] sm:$0xff]
        %v826 = vld [vmem:[#allocation2 + $0x104] sm:$0xf]
        %v827 = vld [vmem:[#allocation2 + $0x108] sm:$0xff]
        %v828 = vld [vmem:[#allocation2 + $0x110] sm:$0xf]
        %v829 = vld [vmem:[#allocation2 + $0x114] sm:$0xff]
        %v830 = vld [vmem:[#allocation2 + $0x11c] sm:$0xf]
        %v831 = vld [vmem:[#allocation2 + $0x120] sm:$0xff]
        %v832 = vld [vmem:[#allocation2 + $0x128] sm:$0xf]
        %v833 = vld [vmem:[#allocation2 + $0x12c] sm:$0xff]
        %v834 = vld [vmem:[#allocation2 + $0x134] sm:$0xf]
        %v835 = vld [vmem:[#allocation2 + $0x138] sm:$0xff]
        %v836 = vld [vmem:[#allocation2 + $0x140] sm:$0xf]
        %v837 = vld [vmem:[#allocation2 + $0x144] sm:$0xff]
        %v838 = vld [vmem:[#allocation2 + $0x14c] sm:$0xf]
        %v839 = vld [vmem:[%s2] sm:$0xff]
        %841 = vset.pattern.permute.xlu0 0
        %842 = vperm.xlu0 %841, %v839
        %v843 = vpop.permute.xlu0 %842
        %v846 = vunpack.c.l.b16 %v782
        %v847 = vunpack.c.h.b16 %v782
        %v848 = vpack.c.b16 %v846, %v846
        %v849 = vpack.c.b16 %v847, %v847
        %v907 = vunpack.c.l.b16 %v783
        %v908 = vunpack.c.h.b16 %v783
        %v909 = vunpack.c.l.b16 %v784
        %v910 = vunpack.c.l.b16 %v785
        %v911 = vunpack.c.h.b16 %v785
        %v912 = vunpack.c.l.b16 %v786
        %v913 = vunpack.c.l.b16 %v787
        %v914 = vunpack.c.h.b16 %v787
        %v915 = vunpack.c.l.b16 %v788
        %v916 = vunpack.c.l.b16 %v789
        %v917 = vunpack.c.h.b16 %v789
        %v918 = vunpack.c.l.b16 %v790
        %v919 = vunpack.c.l.b16 %v791
        %v920 = vunpack.c.h.b16 %v791
        %v921 = vunpack.c.l.b16 %v792
        %v922 = vunpack.c.l.b16 %v793
        %v923 = vunpack.c.h.b16 %v793
        %v924 = vunpack.c.l.b16 %v794
        %v925 = vunpack.c.l.b16 %v795
        %v926 = vunpack.c.h.b16 %v795
        %v927 = vunpack.c.l.b16 %v796
        %v928 = vunpack.c.l.b16 %v797
        %v929 = vunpack.c.h.b16 %v797
        %v930 = vunpack.c.l.b16 %v798
        %v931 = vunpack.c.l.b16 %v799
        %v932 = vunpack.c.h.b16 %v799
        %v933 = vunpack.c.l.b16 %v800
        %v934 = vunpack.c.l.b16 %v801
        %v935 = vunpack.c.h.b16 %v801
        %v936 = vunpack.c.l.b16 %v802
        %v937 = vunpack.c.l.b16 %v803
        %v938 = vunpack.c.h.b16 %v803
        %v939 = vunpack.c.l.b16 %v804
        %v940 = vunpack.c.l.b16 %v805
        %v941 = vunpack.c.h.b16 %v805
        %v942 = vunpack.c.l.b16 %v806
        %v943 = vunpack.c.l.b16 %v807
        %v944 = vunpack.c.h.b16 %v807
        %v945 = vunpack.c.l.b16 %v808
        %v946 = vunpack.c.l.b16 %v809
        %v947 = vunpack.c.h.b16 %v809
        %v948 = vunpack.c.l.b16 %v810
        %v949 = vunpack.c.l.b16 %v811
        %v950 = vunpack.c.h.b16 %v811
        %v951 = vunpack.c.l.b16 %v812
        %v952 = vunpack.c.l.b16 %v813
        %v953 = vunpack.c.h.b16 %v813
        %v954 = vunpack.c.l.b16 %v814
        %v955 = vunpack.c.l.b16 %v815
        %v956 = vunpack.c.h.b16 %v815
        %v957 = vunpack.c.l.b16 %v816
        %v958 = vunpack.c.l.b16 %v817
        %v959 = vunpack.c.h.b16 %v817
        %v960 = vunpack.c.l.b16 %v818
        %v961 = vunpack.c.l.b16 %v819
        %v962 = vunpack.c.h.b16 %v819
        %v963 = vunpack.c.l.b16 %v820
        %v964 = vunpack.c.l.b16 %v821
        %v965 = vunpack.c.h.b16 %v821
        %v966 = vunpack.c.l.b16 %v822
        %v967 = vunpack.c.l.b16 %v823
        %v968 = vunpack.c.h.b16 %v823
        %v969 = vunpack.c.l.b16 %v824
        %v970 = vunpack.c.l.b16 %v825
        %v971 = vunpack.c.h.b16 %v825
        %v972 = vunpack.c.l.b16 %v826
        %v973 = vunpack.c.l.b16 %v827
        %v974 = vunpack.c.h.b16 %v827
        %v975 = vunpack.c.l.b16 %v828
        %v976 = vunpack.c.l.b16 %v829
        %v977 = vunpack.c.h.b16 %v829
        %v978 = vunpack.c.l.b16 %v830
        %v979 = vunpack.c.l.b16 %v831
        %v980 = vunpack.c.h.b16 %v831
        %v981 = vunpack.c.l.b16 %v832
        %v982 = vunpack.c.l.b16 %v833
        %v983 = vunpack.c.h.b16 %v833
        %v984 = vunpack.c.l.b16 %v834
        %v985 = vunpack.c.l.b16 %v835
        %v986 = vunpack.c.h.b16 %v835
        %v987 = vunpack.c.l.b16 %v836
        %v988 = vunpack.c.l.b16 %v837
        %v989 = vunpack.c.h.b16 %v837
        %v990 = vunpack.c.l.b16 %v838
        %v991 = vpack.c.b16 %v910, %v907
        %v992 = vpack.c.b16 %v911, %v908
        %v993 = vpack.c.b16 %v912, %v909
        %v994 = vpack.c.b16 %v916, %v913
        %v995 = vpack.c.b16 %v917, %v914
        %v996 = vpack.c.b16 %v918, %v915
        %v997 = vpack.c.b16 %v922, %v919
        %v998 = vpack.c.b16 %v923, %v920
        %v999 = vpack.c.b16 %v924, %v921
        %v1000 = vpack.c.b16 %v928, %v925
        %v1001 = vpack.c.b16 %v929, %v926
        %v1002 = vpack.c.b16 %v930, %v927
        %v1003 = vpack.c.b16 %v934, %v931
        %v1004 = vpack.c.b16 %v935, %v932
        %v1005 = vpack.c.b16 %v936, %v933
        %v1006 = vpack.c.b16 %v940, %v937
        %v1007 = vpack.c.b16 %v941, %v938
        %v1008 = vpack.c.b16 %v942, %v939
        %v1009 = vpack.c.b16 %v946, %v943
        %v1010 = vpack.c.b16 %v947, %v944
        %v1011 = vpack.c.b16 %v948, %v945
        %v1012 = vpack.c.b16 %v952, %v949
        %v1013 = vpack.c.b16 %v953, %v950
        %v1014 = vpack.c.b16 %v954, %v951
        %v1015 = vpack.c.b16 %v958, %v955
        %v1016 = vpack.c.b16 %v959, %v956
        %v1017 = vpack.c.b16 %v960, %v957
        %v1018 = vpack.c.b16 %v964, %v961
        %v1019 = vpack.c.b16 %v965, %v962
        %v1020 = vpack.c.b16 %v966, %v963
        %v1021 = vpack.c.b16 %v970, %v967
        %v1022 = vpack.c.b16 %v971, %v968
        %v1023 = vpack.c.b16 %v972, %v969
        %v1024 = vpack.c.b16 %v976, %v973
        %v1025 = vpack.c.b16 %v977, %v974
        %v1026 = vpack.c.b16 %v978, %v975
        %v1027 = vpack.c.b16 %v982, %v979
        %v1028 = vpack.c.b16 %v983, %v980
        %v1029 = vpack.c.b16 %v984, %v981
        %v1030 = vpack.c.b16 %v988, %v985
        %v1031 = vpack.c.b16 %v989, %v986
        %v1032 = vpack.c.b16 %v990, %v987
        %vm1075 = vcmask 785408
        %v1077 = vsel %vm1075, %v849, 0
        %1079 = vmatprep.subr.bf16.mxu0 %v1013
        %1080 = vmatpush1.bf16.msra.mxu0 %v1012
        %1081 = vmatprep.subr.bf16.mxu0 %v1010
        %1082 = vmatpush1.bf16.msra.mxu0 %v1009
        %1083 = vmatprep.subr.bf16.mxu0 %v1007
        %1084 = vmatpush1.bf16.msra.mxu0 %v1006
        %1085 = vmatprep.subr.bf16.mxu0 %v1004
        %1086 = vmatpush1.bf16.msra.mxu0 %v1003
        %1087 = vmatprep.subr.bf16.mxu0 %v1001
        %1088 = vmatpush1.bf16.msra.mxu0 %v1000
        %1089 = vmatprep.subr.bf16.mxu0 %v998
        %1090 = vmatpush1.bf16.msra.mxu0 %v997
        %1091 = vmatprep.subr.bf16.mxu0 %v995
        %1092 = vmatpush1.bf16.msra.mxu0 %v994
        %1093 = vmatprep.subr.bf16.mxu0 %v992
        %1094 = vmatpush1.bf16.msra.mxu0 %v991
        %1095 = vmatprep.subr.bf16.mxu0 0
        %1096 = vmatpush2.bf16.msra.mxu0 0
        %1097 = vmatprep.subr.bf16.mxu0 0
        %1098 = vmatpush2.bf16.msra.mxu0 0
        %1099 = vmatprep.subr.bf16.mxu0 %v1031
        %1100 = vmatpush2.bf16.msra.mxu0 %v1030
        %1101 = vmatprep.subr.bf16.mxu0 %v1028
        %1102 = vmatpush2.bf16.msra.mxu0 %v1027
        %1103 = vmatprep.subr.bf16.mxu0 %v1025
        %1104 = vmatpush2.bf16.msra.mxu0 %v1024
        %1105 = vmatprep.subr.bf16.mxu0 %v1022
        %1106 = vmatpush2.bf16.msra.mxu0 %v1021
        %1107 = vmatprep.subr.bf16.mxu0 %v1019
        %1108 = vmatpush2.bf16.msra.mxu0 %v1018
        %1109 = vmatprep.subr.bf16.mxu0 %v1016
        %1110 = vmatpush2.bf16.msra.mxu0 %v1015
        %1111 = vmatprep.mubr.bf16.mxu0 %v1077
        %1112 = vmatmul.mubr.bf16.gmra.mxu0 %v848
        %v1113 = vpop.f32.mrf.mxu0
        %v1114 = vadd.f32 %v843, %v1113
        %v1115 = vpop.f32.mrf.mxu0
        %v1116 = vadd.f32 %v843, %v1115
        %v1117 = vpop.f32.mrf.mxu0
        %v1118 = vpop.f32.mrf.mxu0
        %1119 = vdwg.mxu0
        %1120 = vmatprep.subr.bf16.mxu0 0
        %1121 = vmatpush1.bf16.msra.mxu0 %v1014
        %1122 = vmatprep.subr.bf16.mxu0 0
        %1123 = vmatpush1.bf16.msra.mxu0 %v1011
        %1124 = vmatprep.subr.bf16.mxu0 0
        %1125 = vmatpush1.bf16.msra.mxu0 %v1008
        %1126 = vmatprep.subr.bf16.mxu0 0
        %1127 = vmatpush1.bf16.msra.mxu0 %v1005
        %1128 = vmatprep.subr.bf16.mxu0 0
        %1129 = vmatpush1.bf16.msra.mxu0 %v1002
        %1130 = vmatprep.subr.bf16.mxu0 0
        %1131 = vmatpush1.bf16.msra.mxu0 %v999
        %1132 = vmatprep.subr.bf16.mxu0 0
        %1133 = vmatpush1.bf16.msra.mxu0 %v996
        %1134 = vmatprep.subr.bf16.mxu0 0
        %1135 = vmatpush1.bf16.msra.mxu0 %v993
        %1136 = vmatprep.subr.bf16.mxu0 0
        %1137 = vmatpush2.bf16.msra.mxu0 0
        %1138 = vmatprep.subr.bf16.mxu0 0
        %1139 = vmatpush2.bf16.msra.mxu0 0
        %1140 = vmatprep.subr.bf16.mxu0 0
        %1141 = vmatpush2.bf16.msra.mxu0 %v1032
        %1142 = vmatprep.subr.bf16.mxu0 0
        %1143 = vmatpush2.bf16.msra.mxu0 %v1029
        %1144 = vmatprep.subr.bf16.mxu0 0
        %1145 = vmatpush2.bf16.msra.mxu0 %v1026
        %1146 = vmatprep.subr.bf16.mxu0 0
        %1147 = vmatpush2.bf16.msra.mxu0 %v1023
        %1148 = vmatprep.subr.bf16.mxu0 0
        %1149 = vmatpush2.bf16.msra.mxu0 %v1020
        %1150 = vmatprep.subr.bf16.mxu0 0
        %1151 = vmatpush2.bf16.msra.mxu0 %v1017
        %1152 = vmatprep.mubr.bf16.mxu0 %v1077
        %1153 = vmatmul.mubr.bf16.gmra.mxu0 %v848
        %v1154 = vpop.f32.mrf.mxu0
        %v1155 = vadd.f32 %v843, %v1154
        %v1156 = vpop.f32.mrf.mxu0
        %v1157 = vpop.f32.mrf.mxu0
        %v1158 = vpop.f32.mrf.mxu0
        %1159 = vdwg.mxu0
        %1160 = vst [vmem:[%s186] sm:$0xff] %v1114
        %1161 = vst [vmem:[%s186 + $0x8] sm:$0xff] %v1116
        %1162 = vst.msk [vmem:[%s186 + $0x10] sm:$0xff] %vm1075, %v1155
        %s1163 = sand.u32 %s96, 1
        %s1164 = scalar_lea.sflag [#allocation5], %s1163
        %s1165 = sand.u32 %s96, 1
        %s1166 = smul.addr %s1165, 24
        %s1167 = scalar_lea.vmem [#allocation6], %s1166
        // Predicated region
        $region37: #{tpu_custom_call.1} parent=31 // pred_check
          %p1168 = pneg %p106
        $region38: #{tpu_custom_call.1} parent=31 // pred_check_branch
          %1170 = sbr.rel (%p1168) target = $region40
        $region39: #{tpu_custom_call.1} parent=31 // pred_region
          %s1172 = ssub.s32 384, 384
          %1173 = vsyncadd %s1164, %s1172
          %s1174 = smul.addr %s20, 3
          %s1175 = smul.addr %s1174, 128
          %s1176 = scalar_lea.hbm %s3, %s1175
          %s1178 = sshll.u32 %s1167, 4
          %s1179 = int_to_ptr.vmem [resolvable:$true] %s1178
          %1181 = dma.vmem_to_hbm [thread:$0]  %s1179, 384, %s1176, %s1164
        $region40: #{tpu_custom_call.1} parent=31 // pred_fallthru
          _
      $region32: #{tpu_custom_call.1} parent=5 // pred_fallthru
        _
      %p1182 = scmp.le.s32.totalorder 2, %s15
      // Predicated region
      $region41: #{tpu_custom_call.1} parent=5 // pred_check
        %p1183 = pneg %p1182
      $region42: #{tpu_custom_call.1} parent=5 // pred_check_branch
        %1185 = sbr.rel (%p1183) target = $region44
      $region43: #{tpu_custom_call.1} parent=5 // pred_region
        %s1186 = ssub.s32 %s15, 2
        // Predicated region
        $region45: #{tpu_custom_call.1} parent=43 // pred_check
          %p1187 = pneg %p112
        $region46: #{tpu_custom_call.1} parent=43 // pred_check_branch
          %1189 = sbr.rel (%p1187) target = $region48
        $region47: #{tpu_custom_call.1} parent=43 // pred_region
          %s1190 = sand.u32 %s97, 1
          %s1191 = scalar_lea.sflag [#allocation5], %s1190
          %s1192 = sand.u32 %s97, 1
          %s1193 = smul.addr %s1192, 24
          %s1194 = scalar_lea.vmem [#allocation6], %s1193
          %1195 = dma.done %s1191, 384
        $region48: #{tpu_custom_call.1} parent=43 // pred_fallthru
          _
      $region44: #{tpu_custom_call.1} parent=5 // pred_fallthru
        _
    $region6: #{tpu_custom_call.1} parent=1 // loop_footer
      %s19 = sadd.s32 1, %s15
    $region7: #{tpu_custom_call.1} parent=1 // loop_footer_branch
      %14 = sbr.rel target = $region3
    $region8: #{tpu_custom_call.1} parent=1 // loop_exit
      _
    %1196 = vsyncpa [#allocation4], 1
    %s1197 = scalar_lea.sflag [#allocation4], 1
    %1198 = vsyncpa %s1197, 1
    %1199 = vsyncpa [#allocation5], 1
    %s1200 = scalar_lea.sflag [#allocation5], 1
    %1201 = vsyncpa %s1200, 1

</llo_original>
